<compile_context>
chip_gen: v5e
topology: v5e:2x2
jax: 0.10.0
libtpu: 0.0.40
codegen_flags: <defaults>
</compile_context>

<pallas_src>
import jax
import jax.numpy as jnp
from jax.experimental import pallas as pl
from jax.experimental.pallas import tpu as pltpu


def _scale_permute_kernel(x_ref, s_ref, o_ref):
    # x_ref: (1, HW_BLK, CB)  input tile, channels on lanes (NHWC, spatial flat)
    # s_ref: (1, CB)          per-channel scale row
    # o_ref: (1, CB, HW_BLK)  output tile, flattened spatial on lanes (NCHW)
    #
    # One broadcasted VPU multiply in the lane-dense NHWC layout, then a single
    # (8,128)-aligned XLU transpose of the freshly computed value straight into
    # the output block.  No staging scratch, no value slicing; any ragged tail
    # of the spatial axis is masked by the output DMA, not inside the kernel.
    y = x_ref[0] * s_ref[...]          # (HW_BLK, CB)
    o_ref[0] = jnp.transpose(y)        # (CB, HW_BLK)


def _is_two_tensorcore_chip() -> bool:
    """True on 2-TensorCore-per-chip parts (v7x class); False otherwise."""
    try:
        kind = jax.devices()[0].device_kind.lower()
    except Exception:
        return False
    return ("v7" in kind) or ("tpu7" in kind)


def _pick_channel_block(c: int) -> int:
    # Prefer C // 2: exactly one channel block per TensorCore on 2-TC parts and
    # (with the 2-way spatial split) 4 pipelined grid steps on single-TC parts.
    for cand in (c // 2, 256, 128):
        if cand > 0 and c % cand == 0 and cand % 128 == 0:
            return cand
    return c


def layer_scale_permute(x_nhwc: jax.Array, scale_c11: jax.Array) -> jax.Array:
    """Equivalent of M.forward: scale[C,1,1] * permute(x, NHWC -> NCHW)."""
    N, H, W, C = x_nhwc.shape
    HW = H * W

    # Free layout plumbing (no data movement under jit): flatten the spatial
    # dims and make the scale a lane-dense (1, C) row.
    x_flat = x_nhwc.reshape(N, HW, C)
    s_row = scale_c11.reshape(1, C).astype(x_nhwc.dtype)

    # Spatial blocks of 128 keep every in-kernel transpose (8,128)-aligned and
    # every in-kernel store unmasked; the 196-long axis simply gets a partial
    # last block whose out-of-bounds lanes Pallas never writes back to HBM.
    hw_blk = 128 if HW >= 128 else HW
    num_hw = pl.cdiv(HW, hw_blk)

    cb = _pick_channel_block(C)
    num_cb = C // cb

    # v7x: put one channel block on each TensorCore via CORE_PARALLEL.  On
    # single-TC parts (v5e/v6e) the same grid is just a short pipeline.
    use_core_parallel = (
        _is_two_tensorcore_chip()
        and num_cb == 2
        and hasattr(pltpu, "CORE_PARALLEL")
    )

    elem = jnp.dtype(x_nhwc.dtype).itemsize
    cost = pl.CostEstimate(
        flops=N * HW * C,                                 # one multiply per element
        transcendentals=0,
        bytes_accessed=2 * N * HW * C * elem + C * elem,  # in + out + scale
    )

    if N == 1:
        # Collapse the size-1 batch axis (the module's case): 2-D grid over
        # (channel blocks, spatial blocks).
        grid = (num_cb, num_hw)
        x_map = lambda c, q: (0, q, c)
        s_map = lambda c, q: (0, c)
        o_map = lambda c, q: (0, c, q)
        if use_core_parallel:
            dim_sems = (pltpu.CORE_PARALLEL, pltpu.ARBITRARY)
        else:
            dim_sems = ("arbitrary", "arbitrary")
    else:
        grid = (N, num_cb, num_hw)
        x_map = lambda n, c, q: (n, q, c)
        s_map = lambda n, c, q: (0, c)
        o_map = lambda n, c, q: (n, c, q)
        if use_core_parallel:
            dim_sems = (pltpu.PARALLEL, pltpu.CORE_PARALLEL, pltpu.ARBITRARY)
        else:
            dim_sems = ("parallel", "arbitrary", "arbitrary")

    y_nchw = pl.pallas_call(
        _scale_permute_kernel,
        out_shape=jax.ShapeDtypeStruct((N, C, HW), x_nhwc.dtype),
        grid=grid,
        in_specs=[
            pl.BlockSpec((1, hw_blk, cb), x_map),
            pl.BlockSpec((1, cb), s_map),
        ],
        out_specs=pl.BlockSpec((1, cb, hw_blk), o_map),
        compiler_params=pltpu.CompilerParams(dimension_semantics=dim_sems),
        cost_estimate=cost,
    )(x_flat, s_row)

    # Free reshape: split the contiguous HW axis back into (H, W).
    return y_nchw.reshape(N, C, H, W)


if __name__ == "__main__":
    key = jax.random.PRNGKey(0)
    k_x, k_s = jax.random.split(key)

    # Shapes taken directly from the module: x366 ~ [1, 14, 14, 768],
    # layer_scale31 ~ [768, 1, 1].
    N, H, W, C = 1, 14, 14, 768
    x366 = jax.random.normal(k_x, (N, H, W, C), dtype=jnp.float32)
    layer_scale31 = jax.random.uniform(k_s, (C, 1, 1), dtype=jnp.float32)

    fn = jax.jit(layer_scale_permute)
    out = jax.block_until_ready(fn(x366, layer_scale31))

    # Reference (plain JAX) check of the exact torch semantics.
    ref = layer_scale31.reshape(1, C, 1, 1) * jnp.transpose(x366, (0, 3, 1, 2))
    assert out.shape == (N, C, H, W), out.shape
    assert out.dtype == jnp.float32, out.dtype
    assert jnp.allclose(out, ref, atol=1e-6, rtol=1e-6)

    print("KERNEL_OK")
</pallas_src>

<mosaic_0001>
module attributes {stable_mosaic.version = 11 : i64} {
  func.func @_scale_permute_kernel(%arg0: i32, %arg1: i32, %arg2: memref<1x128x384xf32, #tpu.memory_space<vmem>>, %arg3: memref<1x384xf32, #tpu.memory_space<vmem>>, %arg4: memref<1x384x128xf32, #tpu.memory_space<vmem>>) attributes {dimension_semantics = [#tpu.dimension_semantics<arbitrary>, #tpu.dimension_semantics<arbitrary>], iteration_bounds = array<i64: 2, 2>, scalar_prefetch = 0 : i64, scratch_operands = 0 : i64, tpu.core_type = #tpu.core_type<tc>, window_params = [{transform_indices = @transform_0, window_bounds = array<i64: 1, 128, 384>}, {transform_indices = @transform_1, window_bounds = array<i64: 1, 384>}, {transform_indices = @transform_2, window_bounds = array<i64: 1, 384, 128>}]} {
    %c0 = arith.constant 0 : index
    %c0_0 = arith.constant 0 : index
    %c0_1 = arith.constant 0 : index
    %0 = vector.load %arg2[%c0, %c0_0, %c0_1] : memref<1x128x384xf32, #tpu.memory_space<vmem>>, vector<1x128x384xf32>
    %1 = vector.shape_cast %0 : vector<1x128x384xf32> to vector<128x384xf32>
    %c0_2 = arith.constant 0 : index
    %c0_3 = arith.constant 0 : index
    %2 = vector.load %arg3[%c0_2, %c0_3] : memref<1x384xf32, #tpu.memory_space<vmem>>, vector<1x384xf32>
    %3 = vector.broadcast %2 : vector<1x384xf32> to vector<128x384xf32>
    %4 = arith.mulf %1, %3 : vector<128x384xf32>
    %5 = tpu.transpose %4, [1, 0] : vector<128x384xf32> -> vector<384x128xf32>
    %c0_4 = arith.constant 0 : index
    %c0_5 = arith.constant 0 : index
    %c0_6 = arith.constant 0 : index
    %6 = vector.load %arg4[%c0_4, %c0_5, %c0_6] : memref<1x384x128xf32, #tpu.memory_space<vmem>>, vector<1x384x128xf32>
    %7 = vector.shape_cast %6 : vector<1x384x128xf32> to vector<384x128xf32>
    %8 = vector.shape_cast %5 : vector<384x128xf32> to vector<1x384x128xf32>
    tpu.vector_store %arg4[%c0_4, %c0_5, %c0_6], %8 {strides = array<i32>} : memref<1x384x128xf32, #tpu.memory_space<vmem>>, vector<1x384x128xf32>,
    return
  }
  func.func @transform_0(%arg0: i32, %arg1: i32) -> (i32, i32, i32) {
    %c0_i32 = arith.constant 0 : i32
    %c0_i32_0 = arith.constant 0 : i32
    return %c0_i32, %arg1, %arg0 : i32, i32, i32
  }
  func.func @transform_1(%arg0: i32, %arg1: i32) -> (i32, i32) {
    %c0_i32 = arith.constant 0 : i32
    %c0_i32_0 = arith.constant 0 : i32
    return %c0_i32, %arg0 : i32, i32
  }
  func.func @transform_2(%arg0: i32, %arg1: i32) -> (i32, i32, i32) {
    %c0_i32 = arith.constant 0 : i32
    %c0_i32_0 = arith.constant 0 : i32
    return %c0_i32, %arg0, %arg1 : i32, i32, i32
  }
}

</mosaic_0001>

<llo_original>
// kernel: layer_scale_permute.1
$region0: #{layer_scale_permute.1}
  #allocation0 [shape = 'u32[]', space=smem, size = 0x4, offset = 0x4, fixed_abs, tag = 'smem constant byte address 0x4 - core index']
  #allocation1 [shape = 'u32[72,128]{1,0:T(1,128)}', space=vmem, size = 0x9000, scoped, tag = 'internal scratch']
  %s0 = inlined_call_operand.vmem [shape: f32[1,196,768], index: 0, kind: input, shape index: {}]
  %s1 = inlined_call_operand.vmem [shape: f32[1,768], index: 1, kind: input, shape index: {}]
  %s2 = inlined_call_operand.vmem [shape: f32[1,768,196], index: 2, kind: output, shape index: {}]
  %s3 = sld [smem:[#allocation0]]
  $region105: #{layer_scale_permute.1} parent=0
    _
  %s5 = ssub.s32 1, %s3
  %s6 = scalar_select 0, %s5, %s3
  $region1: #{layer_scale_permute.1} parent=0
    #allocation2 [shape = 'u8[393216]{0}', space=vmem, size = 0x60000, scoped, tag = 'input window, operand 0']
    #allocation3 [shape = 'u8[393216]{0}', space=vmem, size = 0x60000, scoped, tag = 'output window, operand 0']
    loop: start=0, step=1, limit=6
    $region2: #{layer_scale_permute.1} parent=1 // loop_pre_header
      _
    $region3: #{layer_scale_permute.1} parent=1 // loop_header
      %s8 = sphi 0, %s12
      %p9 = scmp.ge.s32.totalorder %s8, 6
      %s15 = sphi 0, %s27
      %s16 = sphi 0, %s23
      %s17 = sphi 0, %s15
      %s18 = sphi 0, %s16
      %s19 = sphi 0, %s17
      %s20 = sphi 0, %s18
      %s32 = sphi 0, %s34
      %s35 = sphi 0, %s32
      %s36 = sphi 0, %s35
      %s52 = sphi 0, %s36
      %s58 = sphi 0, %s60
      %s61 = sphi 0, %s58
      %s62 = sphi 0, %s61
      %s78 = sphi 0, %s62
      %s86 = sphi 0, %s88
      %s89 = sphi 0, %s86
      %s90 = sphi 0, %s89
      %s106 = sphi 0, %s90
    $region4: #{layer_scale_permute.1} parent=1 // loop_header_branch
      %11 = sbr.rel (%p9) target = $region8
    $region5: #{layer_scale_permute.1} parent=1 // loop_body
      %s13 = ssub.s32 %s8, 1
      %s14 = ssub.s32 %s8, 2
      %s21 = sadd.s32 1, %s16
      %p22 = scmp.ge.s32.totalorder %s21, 2
      %s23 = scalar_select %p22, 0, %s21
      %s24 = sadd.s32 1, %s15
      %s25 = scalar_select %p22, %s24, %s15
      %p26 = scmp.ge.s32.totalorder %s25, 2
      %s27 = scalar_select %p26, 0, %s25
      %s28 = ssub.s32 %s16, %s23
      %s29 = ssub.s32 %s15, %s27
      %s30 = sor.u32 %s28, %s29
      %p31 = scmp.eq.s32.totalorder %s30, 0
      %s33 = sadd.s32 %s32, 1
      %s34 = scalar_select %p31, %s32, %s33
      %p37 = pneg %p31
      %p38 = scmp.eq.s32.totalorder %s8, 3
      %p39 = por %p37, %p38
      %p40 = scmp.ne.s32.totalorder %s32, %s35
      %p41 = scmp.eq.s32.totalorder %s8, 0
      %p42 = por %p40, %p41
      %p43 = scmp.ne.s32.totalorder %s32, %s35
      %p44 = scmp.eq.s32.totalorder %s13, 3
      %p45 = por %p43, %p44
      %p46 = scmp.ne.s32.totalorder %s35, %s36
      %p47 = scmp.eq.s32.totalorder %s13, 0
      %p48 = por %p46, %p47
      %p49 = scmp.ne.s32.totalorder %s35, %s36
      %p50 = scmp.eq.s32.totalorder %s14, 3
      %p51 = por %p49, %p50
      %p53 = scmp.ne.s32.totalorder %s36, %s52
      %p54 = scmp.eq.s32.totalorder %s14, 0
      %p55 = por %p53, %p54
      %s56 = ssub.s32 %s15, %s27
      %p57 = scmp.eq.s32.totalorder %s56, 0
      %s59 = sadd.s32 %s58, 1
      %s60 = scalar_select %p57, %s58, %s59
      %p63 = pneg %p57
      %p64 = scmp.eq.s32.totalorder %s8, 3
      %p65 = por %p63, %p64
      %p66 = scmp.ne.s32.totalorder %s58, %s61
      %p67 = scmp.eq.s32.totalorder %s8, 0
      %p68 = por %p66, %p67
      %p69 = scmp.ne.s32.totalorder %s58, %s61
      %p70 = scmp.eq.s32.totalorder %s13, 3
      %p71 = por %p69, %p70
      %p72 = scmp.ne.s32.totalorder %s61, %s62
      %p73 = scmp.eq.s32.totalorder %s13, 0
      %p74 = por %p72, %p73
      %p75 = scmp.ne.s32.totalorder %s61, %s62
      %p76 = scmp.eq.s32.totalorder %s14, 3
      %p77 = por %p75, %p76
      %p79 = scmp.ne.s32.totalorder %s62, %s78
      %p80 = scmp.eq.s32.totalorder %s14, 0
      %p81 = por %p79, %p80
      %s82 = ssub.s32 %s15, %s27
      %s83 = ssub.s32 %s16, %s23
      %s84 = sor.u32 %s82, %s83
      %p85 = scmp.eq.s32.totalorder %s84, 0
      %s87 = sadd.s32 %s86, 1
      %s88 = scalar_select %p85, %s86, %s87
      %p91 = pneg %p85
      %p92 = scmp.eq.s32.totalorder %s8, 3
      %p93 = por %p91, %p92
      %p94 = scmp.ne.s32.totalorder %s86, %s89
      %p95 = scmp.eq.s32.totalorder %s8, 0
      %p96 = por %p94, %p95
      %p97 = scmp.ne.s32.totalorder %s86, %s89
      %p98 = scmp.eq.s32.totalorder %s13, 3
      %p99 = por %p97, %p98
      %p100 = scmp.ne.s32.totalorder %s89, %s90
      %p101 = scmp.eq.s32.totalorder %s13, 0
      %p102 = por %p100, %p101
      %p103 = scmp.ne.s32.totalorder %s89, %s90
      %p104 = scmp.eq.s32.totalorder %s14, 3
      %p105 = por %p103, %p104
      %p107 = scmp.ne.s32.totalorder %s90, %s106
      %p108 = scmp.eq.s32.totalorder %s14, 0
      %p109 = por %p107, %p108
      %p110 = scmp.le.s32.totalorder 1, %s8
      %p111 = scmp.lt.s32.totalorder %s8, 5
      %p112 = pnand %p110, %p111
      %p113 = pneg %p112
      // Predicated region
      $region9: #{layer_scale_permute.1} parent=5 // pred_check
        _
      $region10: #{layer_scale_permute.1} parent=5 // pred_check_branch
        %115 = sbr.rel (%p112) target = $region12
      $region11: #{layer_scale_permute.1} parent=5 // pred_region
        %s116 = ssub.s32 %s8, 1
      $region12: #{layer_scale_permute.1} parent=5 // pred_fallthru
        _
      %p117 = scmp.lt.s32.totalorder %s8, 4
      // Predicated region
      $region13: #{layer_scale_permute.1} parent=5 // pred_check
        %p118 = pneg %p117
      $region14: #{layer_scale_permute.1} parent=5 // pred_check_branch
        %120 = sbr.rel (%p118) target = $region16
      $region15: #{layer_scale_permute.1} parent=5 // pred_region
        // Predicated region
        $region17: #{layer_scale_permute.1} parent=15 // pred_check
          %p121 = pneg %p42
        $region18: #{layer_scale_permute.1} parent=15 // pred_check_branch
          %123 = sbr.rel (%p121) target = $region20
        $region19: #{layer_scale_permute.1} parent=15 // pred_region
          %s124 = sand.u32 %s32, 1
          %s125 = sand.u32 %s32, 1
          %s126 = smul.addr %s125, 384
          %s127 = scalar_lea.vmem [#allocation2], %s126
          %s128 = smul.u32 16, %s16
          %s129 = smul.u32 3, %s15
          %s130 = ssub.s32 25, %s128
          %p131 = scmp.lt.s32.totalorder %s130, 16
          %s132 = scalar_select %p131, %s130, 16
          %s133 = smul.u32 8, %s132
          %s134 = smul.u32 %s133, 3
          %p135 = scmp.ne.s32.totalorder 0, %s134
          %s136 = smul.addr %s128, 6
          %s137 = sadd.s32 %s129, %s136
          %s138 = smul.addr %s137, 8
          %s139 = scalar_lea.vmem %s0, %s138
          // Predicated region
          $region21: #{layer_scale_permute.1} parent=19 // pred_check
            %p140 = pneg %p135
          $region22: #{layer_scale_permute.1} parent=19 // pred_check_branch
            %142 = sbr.rel (%p140) target = $region24
          $region23: #{layer_scale_permute.1} parent=19 // pred_region
            // Predicated region
            $region25: #{layer_scale_permute.1} parent=23 // pred_check
              _
            $region26: #{layer_scale_permute.1} parent=23 // pred_check_branch
              %144 = sbr.rel (0) target = $region28
            $region27: #{layer_scale_permute.1} parent=23 // pred_region
              %s145 = sdiv.u32.pop %s132, 11
              %s146 = srem.u32.pop %s132, 11
              // While loop
              $region29: #{layer_scale_permute.1} parent=27 // loop_pre_header
                _
              $region30: #{layer_scale_permute.1} parent=27 // loop_header
                %s148 = sphi 0, %s150
                %p149 = scmp.ge.s32.totalorder %s148, %s145
                %s153 = sphi 0, %s224
                %s154 = sphi %s139, %s227
                %s155 = sphi %s127, %s228
              $region31: #{layer_scale_permute.1} parent=27 // loop_header_branch
                %152 = sbr.rel (%p149) target = $region35
              $region32: #{layer_scale_permute.1} parent=27 // loop_body
                %v156 = vld [vmem:[%s154] sm:$0xff]
                %157 = vst [vmem:[%s155] sm:$0xff] %v156
                %v158 = vld [vmem:[%s154 + $0x30] sm:$0xff]
                %159 = vst [vmem:[%s155 + $0x18] sm:$0xff] %v158
                %v160 = vld [vmem:[%s154 + $0x60] sm:$0xff]
                %161 = vst [vmem:[%s155 + $0x30] sm:$0xff] %v160
                %v162 = vld [vmem:[%s154 + $0x90] sm:$0xff]
                %163 = vst [vmem:[%s155 + $0x48] sm:$0xff] %v162
                %v164 = vld [vmem:[%s154 + $0xc0] sm:$0xff]
                %165 = vst [vmem:[%s155 + $0x60] sm:$0xff] %v164
                %v166 = vld [vmem:[%s154 + $0xf0] sm:$0xff]
                %167 = vst [vmem:[%s155 + $0x78] sm:$0xff] %v166
                %v168 = vld [vmem:[%s154 + $0x120] sm:$0xff]
                %169 = vst [vmem:[%s155 + $0x90] sm:$0xff] %v168
                %v170 = vld [vmem:[%s154 + $0x150] sm:$0xff]
                %171 = vst [vmem:[%s155 + $0xa8] sm:$0xff] %v170
                %v172 = vld [vmem:[%s154 + $0x180] sm:$0xff]
                %173 = vst [vmem:[%s155 + $0xc0] sm:$0xff] %v172
                %v174 = vld [vmem:[%s154 + $0x1b0] sm:$0xff]
                %175 = vst [vmem:[%s155 + $0xd8] sm:$0xff] %v174
                %v176 = vld [vmem:[%s154 + $0x1e0] sm:$0xff]
                %177 = vst [vmem:[%s155 + $0xf0] sm:$0xff] %v176
                %v178 = vld [vmem:[%s154 + $0x8] sm:$0xff]
                %179 = vst [vmem:[%s155 + $0x8] sm:$0xff] %v178
                %v180 = vld [vmem:[%s154 + $0x38] sm:$0xff]
                %181 = vst [vmem:[%s155 + $0x20] sm:$0xff] %v180
                %v182 = vld [vmem:[%s154 + $0x68] sm:$0xff]
                %183 = vst [vmem:[%s155 + $0x38] sm:$0xff] %v182
                %v184 = vld [vmem:[%s154 + $0x98] sm:$0xff]
                %185 = vst [vmem:[%s155 + $0x50] sm:$0xff] %v184
                %v186 = vld [vmem:[%s154 + $0xc8] sm:$0xff]
                %187 = vst [vmem:[%s155 + $0x68] sm:$0xff] %v186
                %v188 = vld [vmem:[%s154 + $0xf8] sm:$0xff]
                %189 = vst [vmem:[%s155 + $0x80] sm:$0xff] %v188
                %v190 = vld [vmem:[%s154 + $0x128] sm:$0xff]
                %191 = vst [vmem:[%s155 + $0x98] sm:$0xff] %v190
                %v192 = vld [vmem:[%s154 + $0x158] sm:$0xff]
                %193 = vst [vmem:[%s155 + $0xb0] sm:$0xff] %v192
                %v194 = vld [vmem:[%s154 + $0x188] sm:$0xff]
                %195 = vst [vmem:[%s155 + $0xc8] sm:$0xff] %v194
                %v196 = vld [vmem:[%s154 + $0x1b8] sm:$0xff]
                %197 = vst [vmem:[%s155 + $0xe0] sm:$0xff] %v196
                %v198 = vld [vmem:[%s154 + $0x1e8] sm:$0xff]
                %199 = vst [vmem:[%s155 + $0xf8] sm:$0xff] %v198
                %v200 = vld [vmem:[%s154 + $0x10] sm:$0xff]
                %201 = vst [vmem:[%s155 + $0x10] sm:$0xff] %v200
                %v202 = vld [vmem:[%s154 + $0x40] sm:$0xff]
                %203 = vst [vmem:[%s155 + $0x28] sm:$0xff] %v202
                %v204 = vld [vmem:[%s154 + $0x70] sm:$0xff]
                %205 = vst [vmem:[%s155 + $0x40] sm:$0xff] %v204
                %v206 = vld [vmem:[%s154 + $0xa0] sm:$0xff]
                %207 = vst [vmem:[%s155 + $0x58] sm:$0xff] %v206
                %v208 = vld [vmem:[%s154 + $0xd0] sm:$0xff]
                %209 = vst [vmem:[%s155 + $0x70] sm:$0xff] %v208
                %v210 = vld [vmem:[%s154 + $0x100] sm:$0xff]
                %211 = vst [vmem:[%s155 + $0x88] sm:$0xff] %v210
                %v212 = vld [vmem:[%s154 + $0x130] sm:$0xff]
                %213 = vst [vmem:[%s155 + $0xa0] sm:$0xff] %v212
                %v214 = vld [vmem:[%s154 + $0x160] sm:$0xff]
                %215 = vst [vmem:[%s155 + $0xb8] sm:$0xff] %v214
                %v216 = vld [vmem:[%s154 + $0x190] sm:$0xff]
                %217 = vst [vmem:[%s155 + $0xd0] sm:$0xff] %v216
                %v218 = vld [vmem:[%s154 + $0x1c0] sm:$0xff]
                %219 = vst [vmem:[%s155 + $0xe8] sm:$0xff] %v218
                %v220 = vld [vmem:[%s154 + $0x1f0] sm:$0xff]
                %221 = vst [vmem:[%s155 + $0x100] sm:$0xff] %v220
                %s222 = sadd.s32 1, %s153
                %p223 = scmp.ge.s32.totalorder %s222, %s145
                %s224 = scalar_select %p223, 0, %s222
                %s225 = smul.u32 %s224, 528
                %s226 = smul.u32 %s224, 264
                %s227 = scalar_lea.vmem %s139, %s225
                %s228 = scalar_lea.vmem %s127, %s226 [#allocation2]
              $region33: #{layer_scale_permute.1} parent=27 // loop_footer
                %s150 = sadd.s32 %s148, 1
              $region34: #{layer_scale_permute.1} parent=27 // loop_footer_branch
                %147 = sbr.rel target = $region30
              $region35: #{layer_scale_permute.1} parent=27 // loop_exit
                _
              %s229 = sdiv.u32.pop %s132, 11
              %s230 = srem.u32.pop %s132, 11
              %s231 = smul.u32 %s229, 11
              %s232 = smul.u32 48, %s231
              %s233 = scalar_lea.vmem %s139, %s232
              %s234 = smul.u32 24, %s231
              %s235 = scalar_lea.vmem %s127, %s234 [#allocation2]
              // While loop
              $region36: #{layer_scale_permute.1} parent=27 // loop_pre_header
                _
              $region37: #{layer_scale_permute.1} parent=27 // loop_header
                %s237 = sphi 0, %s239
                %p238 = scmp.ge.s32.totalorder %s237, %s230
                %s242 = sphi 0, %s253
                %s243 = sphi %s233, %s256
                %s244 = sphi %s235, %s257
              $region38: #{layer_scale_permute.1} parent=27 // loop_header_branch
                %241 = sbr.rel (%p238) target = $region42
              $region39: #{layer_scale_permute.1} parent=27 // loop_body
                %v245 = vld [vmem:[%s243] sm:$0xff]
                %246 = vst [vmem:[%s244] sm:$0xff] %v245
                %v247 = vld [vmem:[%s243 + $0x8] sm:$0xff]
                %248 = vst [vmem:[%s244 + $0x8] sm:$0xff] %v247
                %v249 = vld [vmem:[%s243 + $0x10] sm:$0xff]
                %250 = vst [vmem:[%s244 + $0x10] sm:$0xff] %v249
                %s251 = sadd.s32 1, %s242
                %p252 = scmp.ge.s32.totalorder %s251, %s230
                %s253 = scalar_select %p252, 0, %s251
                %s254 = smul.u32 %s253, 48
                %s255 = smul.u32 %s253, 24
                %s256 = scalar_lea.vmem %s233, %s254
                %s257 = scalar_lea.vmem %s235, %s255 [#allocation2]
              $region40: #{layer_scale_permute.1} parent=27 // loop_footer
                %s239 = sadd.s32 %s237, 1
              $region41: #{layer_scale_permute.1} parent=27 // loop_footer_branch
                %236 = sbr.rel target = $region37
              $region42: #{layer_scale_permute.1} parent=27 // loop_exit
                _
            $region28: #{layer_scale_permute.1} parent=23 // pred_fallthru
              _
            // Predicated region
            $region43: #{layer_scale_permute.1} parent=23 // pred_check
              _
            $region44: #{layer_scale_permute.1} parent=23 // pred_check_branch
              %259 = sbr.rel target = $region46
            $region45: #{layer_scale_permute.1} parent=23 // pred_region
              _
            $region46: #{layer_scale_permute.1} parent=23 // pred_fallthru
              _
          $region24: #{layer_scale_permute.1} parent=19 // pred_fallthru
            _
          %260 = vnop
        $region20: #{layer_scale_permute.1} parent=15 // pred_fallthru
          _
        // Predicated region
        $region47: #{layer_scale_permute.1} parent=15 // pred_check
          %p261 = pneg %p68
        $region48: #{layer_scale_permute.1} parent=15 // pred_check_branch
          %263 = sbr.rel (%p261) target = $region50
        $region49: #{layer_scale_permute.1} parent=15 // pred_region
          %s264 = smul.u32 3, %s15
          %p265 = scmp.lt.s32.totalorder %s264, 5
          %s266 = scalar_select %p265, %s264, 5
          %s267 = scalar_lea.vmem %s1, %s266
          %s268 = smul.u32 3, %s15
        $region50: #{layer_scale_permute.1} parent=15 // pred_fallthru
          _
      $region16: #{layer_scale_permute.1} parent=5 // pred_fallthru
        _
      %p269 = scmp.le.s32.totalorder 1, %s8
      %p270 = scmp.lt.s32.totalorder %s8, 5
      %p271 = pnand %p269, %p270
      %p272 = pneg %p271
      // Predicated region
      $region51: #{layer_scale_permute.1} parent=5 // pred_check
        _
      $region52: #{layer_scale_permute.1} parent=5 // pred_check_branch
        %274 = sbr.rel (%p271) target = $region54
      $region53: #{layer_scale_permute.1} parent=5 // pred_region
        %s275 = ssub.s32 %s8, 1
        %s276 = sand.u32 %s35, 1
        %s277 = sand.u32 %s35, 1
        %s278 = smul.addr %s277, 384
        %s279 = scalar_lea.vmem [#allocation2], %s278
        // Predicated region
        $region55: #{layer_scale_permute.1} parent=53 // pred_check
          %p280 = pneg %p48
        $region56: #{layer_scale_permute.1} parent=53 // pred_check_branch
          %282 = sbr.rel (%p280) target = $region58
        $region57: #{layer_scale_permute.1} parent=53 // pred_region
          _
        $region58: #{layer_scale_permute.1} parent=53 // pred_fallthru
          _
        %s283 = sand.u32 %s35, 1
        %s284 = sand.u32 %s35, 1
        %s285 = smul.addr %s284, 384
        %s286 = scalar_lea.vmem [#allocation2], %s285
        %p287 = pneg %p48
        %p288 = pneg %p45
        %s289 = smul.u32 3, %s17
        %p290 = scmp.lt.s32.totalorder %s289, 5
        %s291 = scalar_select %p290, %s289, 5
        %s292 = scalar_lea.vmem %s1, %s291
        %p293 = pneg %p74
        %p294 = pneg %p71
        %p295 = pneg %p102
        %p296 = pneg %p99
        %s297 = sand.u32 %s89, 1
        %s298 = sand.u32 %s89, 1
        %s299 = smul.addr %s298, 384
        %s300 = scalar_lea.vmem [#allocation3], %s299
        %s301 = smul.u32 16, %s18
        %s302 = smul.u32 3, %s17
        %s303 = ssub.s32 25, %s301
        %p304 = scmp.lt.s32.totalorder %s303, 16
        %s305 = scalar_select %p304, %s303, 16
        %s306 = smul.u32 8, %s305
        %s307 = smul.u32 %s306, 3
        %s308 = smul.u32 3, %s17
        %p309 = scmp.lt.s32.totalorder %s308, 5
        %s310 = scalar_select %p309, %s308, 5
        %s311 = scalar_lea.vmem %s1, %s310
        %s312 = smul.u32 3, %s17
        %s313 = smul.u32 48, %s17
        %v314 = vld [vmem:[%s279] sm:$0xff]
        %v315 = vld [vmem:[%s279 + $0x8] sm:$0xff]
        %v316 = vld [vmem:[%s279 + $0x10] sm:$0xff]
        %v317 = vld [vmem:[%s279 + $0x18] sm:$0xff]
        %v318 = vld [vmem:[%s279 + $0x20] sm:$0xff]
        %v319 = vld [vmem:[%s279 + $0x28] sm:$0xff]
        %v320 = vld [vmem:[%s279 + $0x30] sm:$0xff]
        %v321 = vld [vmem:[%s279 + $0x38] sm:$0xff]
        %v322 = vld [vmem:[%s279 + $0x40] sm:$0xff]
        %v323 = vld [vmem:[%s279 + $0x48] sm:$0xff]
        %v324 = vld [vmem:[%s279 + $0x50] sm:$0xff]
        %v325 = vld [vmem:[%s279 + $0x58] sm:$0xff]
        %v326 = vld [vmem:[%s279 + $0x60] sm:$0xff]
        %v327 = vld [vmem:[%s279 + $0x68] sm:$0xff]
        %v328 = vld [vmem:[%s279 + $0x70] sm:$0xff]
        %v329 = vld [vmem:[%s279 + $0x78] sm:$0xff]
        %v330 = vld [vmem:[%s279 + $0x80] sm:$0xff]
        %v331 = vld [vmem:[%s279 + $0x88] sm:$0xff]
        %v332 = vld [vmem:[%s279 + $0x90] sm:$0xff]
        %v333 = vld [vmem:[%s279 + $0x98] sm:$0xff]
        %v334 = vld [vmem:[%s279 + $0xa0] sm:$0xff]
        %v335 = vld [vmem:[%s279 + $0xa8] sm:$0xff]
        %v336 = vld [vmem:[%s279 + $0xb0] sm:$0xff]
        %v337 = vld [vmem:[%s279 + $0xb8] sm:$0xff]
        %v338 = vld [vmem:[%s279 + $0xc0] sm:$0xff]
        %v339 = vld [vmem:[%s279 + $0xc8] sm:$0xff]
        %v340 = vld [vmem:[%s279 + $0xd0] sm:$0xff]
        %v341 = vld [vmem:[%s279 + $0xd8] sm:$0xff]
        %v342 = vld [vmem:[%s279 + $0xe0] sm:$0xff]
        %v343 = vld [vmem:[%s279 + $0xe8] sm:$0xff]
        %v344 = vld [vmem:[%s279 + $0xf0] sm:$0xff]
        %v345 = vld [vmem:[%s279 + $0xf8] sm:$0xff]
        %v346 = vld [vmem:[%s279 + $0x100] sm:$0xff]
        %v347 = vld [vmem:[%s279 + $0x108] sm:$0xff]
        %v348 = vld [vmem:[%s279 + $0x110] sm:$0xff]
        %v349 = vld [vmem:[%s279 + $0x118] sm:$0xff]
        %v350 = vld [vmem:[%s279 + $0x120] sm:$0xff]
        %v351 = vld [vmem:[%s279 + $0x128] sm:$0xff]
        %v352 = vld [vmem:[%s279 + $0x130] sm:$0xff]
        %v353 = vld [vmem:[%s279 + $0x138] sm:$0xff]
        %v354 = vld [vmem:[%s279 + $0x140] sm:$0xff]
        %v355 = vld [vmem:[%s279 + $0x148] sm:$0xff]
        %v356 = vld [vmem:[%s279 + $0x150] sm:$0xff]
        %v357 = vld [vmem:[%s279 + $0x158] sm:$0xff]
        %v358 = vld [vmem:[%s279 + $0x160] sm:$0xff]
        %v359 = vld [vmem:[%s279 + $0x168] sm:$0xff]
        %v360 = vld [vmem:[%s279 + $0x170] sm:$0xff]
        %v361 = vld [vmem:[%s279 + $0x178] sm:$0xff]
        %v362 = vld [vmem:[%s311] sm:$0x7]
        %v364 = vperm.slane %v362, 0
        %v365 = vperm.slane %v362, 1
        %v366 = vperm.slane %v362, 2
        %v370 = vmul.f32 %v314, %v364
        %v371 = vmul.f32 %v315, %v365
        %v372 = vmul.f32 %v316, %v366
        %v373 = vmul.f32 %v317, %v364
        %v374 = vmul.f32 %v318, %v365
        %v375 = vmul.f32 %v319, %v366
        %v376 = vmul.f32 %v320, %v364
        %v377 = vmul.f32 %v321, %v365
        %v378 = vmul.f32 %v322, %v366
        %v379 = vmul.f32 %v323, %v364
        %v380 = vmul.f32 %v324, %v365
        %v381 = vmul.f32 %v325, %v366
        %v382 = vmul.f32 %v326, %v364
        %v383 = vmul.f32 %v327, %v365
        %v384 = vmul.f32 %v328, %v366
        %v385 = vmul.f32 %v329, %v364
        %v386 = vmul.f32 %v330, %v365
        %v387 = vmul.f32 %v331, %v366
        %v388 = vmul.f32 %v332, %v364
        %v389 = vmul.f32 %v333, %v365
        %v390 = vmul.f32 %v334, %v366
        %v391 = vmul.f32 %v335, %v364
        %v392 = vmul.f32 %v336, %v365
        %v393 = vmul.f32 %v337, %v366
        %v394 = vmul.f32 %v338, %v364
        %v395 = vmul.f32 %v339, %v365
        %v396 = vmul.f32 %v340, %v366
        %v397 = vmul.f32 %v341, %v364
        %v398 = vmul.f32 %v342, %v365
        %v399 = vmul.f32 %v343, %v366
        %v400 = vmul.f32 %v344, %v364
        %v401 = vmul.f32 %v345, %v365
        %v402 = vmul.f32 %v346, %v366
        %v403 = vmul.f32 %v347, %v364
        %v404 = vmul.f32 %v348, %v365
        %v405 = vmul.f32 %v349, %v366
        %v406 = vmul.f32 %v350, %v364
        %v407 = vmul.f32 %v351, %v365
        %v408 = vmul.f32 %v352, %v366
        %v409 = vmul.f32 %v353, %v364
        %v410 = vmul.f32 %v354, %v365
        %v411 = vmul.f32 %v355, %v366
        %v412 = vmul.f32 %v356, %v364
        %v413 = vmul.f32 %v357, %v365
        %v414 = vmul.f32 %v358, %v366
        %v415 = vmul.f32 %v359, %v364
        %v416 = vmul.f32 %v360, %v365
        %v417 = vmul.f32 %v361, %v366
        %418 = vxpose.xlu0.b32.start [1/16] %v370, 128
        %419 = vxpose.xlu0.b32.cont [2/16] %v373, 128
        %420 = vxpose.xlu0.b32.cont [3/16] %v376, 128
        %421 = vxpose.xlu0.b32.cont [4/16] %v379, 128
        %422 = vxpose.xlu0.b32.cont [5/16] %v382, 128
        %423 = vxpose.xlu0.b32.cont [6/16] %v385, 128
        %424 = vxpose.xlu0.b32.cont [7/16] %v388, 128
        %425 = vxpose.xlu0.b32.cont [8/16] %v391, 128
        %426 = vxpose.xlu0.b32.cont [9/16] %v394, 128
        %427 = vxpose.xlu0.b32.cont [10/16] %v397, 128
        %428 = vxpose.xlu0.b32.cont [11/16] %v400, 128
        %429 = vxpose.xlu0.b32.cont [12/16] %v403, 128
        %430 = vxpose.xlu0.b32.cont [13/16] %v406, 128
        %431 = vxpose.xlu0.b32.cont [14/16] %v409, 128
        %432 = vxpose.xlu0.b32.cont [15/16] %v412, 128
        %433 = vxpose.xlu0.b32.end [16/16] %v415, 128
        %v434 = vpop.trf.xlu0
        %v435 = vpop.trf.xlu0
        %v436 = vpop.trf.xlu0
        %v437 = vpop.trf.xlu0
        %v438 = vpop.trf.xlu0
        %v439 = vpop.trf.xlu0
        %v440 = vpop.trf.xlu0
        %v441 = vpop.trf.xlu0
        %v442 = vpop.trf.xlu0
        %v443 = vpop.trf.xlu0
        %v444 = vpop.trf.xlu0
        %v445 = vpop.trf.xlu0
        %v446 = vpop.trf.xlu0
        %v447 = vpop.trf.xlu0
        %v448 = vpop.trf.xlu0
        %v449 = vpop.trf.xlu0
        %450 = vxpose.xlu0.b32.start [1/16] %v371, 128
        %451 = vxpose.xlu0.b32.cont [2/16] %v374, 128
        %452 = vxpose.xlu0.b32.cont [3/16] %v377, 128
        %453 = vxpose.xlu0.b32.cont [4/16] %v380, 128
        %454 = vxpose.xlu0.b32.cont [5/16] %v383, 128
        %455 = vxpose.xlu0.b32.cont [6/16] %v386, 128
        %456 = vxpose.xlu0.b32.cont [7/16] %v389, 128
        %457 = vxpose.xlu0.b32.cont [8/16] %v392, 128
        %458 = vxpose.xlu0.b32.cont [9/16] %v395, 128
        %459 = vxpose.xlu0.b32.cont [10/16] %v398, 128
        %460 = vxpose.xlu0.b32.cont [11/16] %v401, 128
        %461 = vxpose.xlu0.b32.cont [12/16] %v404, 128
        %462 = vxpose.xlu0.b32.cont [13/16] %v407, 128
        %463 = vxpose.xlu0.b32.cont [14/16] %v410, 128
        %464 = vxpose.xlu0.b32.cont [15/16] %v413, 128
        %465 = vxpose.xlu0.b32.end [16/16] %v416, 128
        %v466 = vpop.trf.xlu0
        %v467 = vpop.trf.xlu0
        %v468 = vpop.trf.xlu0
        %v469 = vpop.trf.xlu0
        %v470 = vpop.trf.xlu0
        %v471 = vpop.trf.xlu0
        %v472 = vpop.trf.xlu0
        %v473 = vpop.trf.xlu0
        %v474 = vpop.trf.xlu0
        %v475 = vpop.trf.xlu0
        %v476 = vpop.trf.xlu0
        %v477 = vpop.trf.xlu0
        %v478 = vpop.trf.xlu0
        %v479 = vpop.trf.xlu0
        %v480 = vpop.trf.xlu0
        %v481 = vpop.trf.xlu0
        %482 = vxpose.xlu0.b32.start [1/16] %v372, 128
        %483 = vxpose.xlu0.b32.cont [2/16] %v375, 128
        %484 = vxpose.xlu0.b32.cont [3/16] %v378, 128
        %485 = vxpose.xlu0.b32.cont [4/16] %v381, 128
        %486 = vxpose.xlu0.b32.cont [5/16] %v384, 128
        %487 = vxpose.xlu0.b32.cont [6/16] %v387, 128
        %488 = vxpose.xlu0.b32.cont [7/16] %v390, 128
        %489 = vxpose.xlu0.b32.cont [8/16] %v393, 128
        %490 = vxpose.xlu0.b32.cont [9/16] %v396, 128
        %491 = vxpose.xlu0.b32.cont [10/16] %v399, 128
        %492 = vxpose.xlu0.b32.cont [11/16] %v402, 128
        %493 = vxpose.xlu0.b32.cont [12/16] %v405, 128
        %494 = vxpose.xlu0.b32.cont [13/16] %v408, 128
        %495 = vxpose.xlu0.b32.cont [14/16] %v411, 128
        %496 = vxpose.xlu0.b32.cont [15/16] %v414, 128
        %497 = vxpose.xlu0.b32.end [16/16] %v417, 128
        %v498 = vpop.trf.xlu0
        %v499 = vpop.trf.xlu0
        %v500 = vpop.trf.xlu0
        %v501 = vpop.trf.xlu0
        %v502 = vpop.trf.xlu0
        %v503 = vpop.trf.xlu0
        %v504 = vpop.trf.xlu0
        %v505 = vpop.trf.xlu0
        %v506 = vpop.trf.xlu0
        %v507 = vpop.trf.xlu0
        %v508 = vpop.trf.xlu0
        %v509 = vpop.trf.xlu0
        %v510 = vpop.trf.xlu0
        %v511 = vpop.trf.xlu0
        %v512 = vpop.trf.xlu0
        %v513 = vpop.trf.xlu0
        %514 = vst [vmem:[%s300] sm:$0xff] %v434
        %515 = vst [vmem:[%s300 + $0x8] sm:$0xff] %v435
        %516 = vst [vmem:[%s300 + $0x10] sm:$0xff] %v436
        %517 = vst [vmem:[%s300 + $0x18] sm:$0xff] %v437
        %518 = vst [vmem:[%s300 + $0x20] sm:$0xff] %v438
        %519 = vst [vmem:[%s300 + $0x28] sm:$0xff] %v439
        %520 = vst [vmem:[%s300 + $0x30] sm:$0xff] %v440
        %521 = vst [vmem:[%s300 + $0x38] sm:$0xff] %v441
        %522 = vst [vmem:[%s300 + $0x40] sm:$0xff] %v442
        %523 = vst [vmem:[%s300 + $0x48] sm:$0xff] %v443
        %524 = vst [vmem:[%s300 + $0x50] sm:$0xff] %v444
        %525 = vst [vmem:[%s300 + $0x58] sm:$0xff] %v445
        %526 = vst [vmem:[%s300 + $0x60] sm:$0xff] %v446
        %527 = vst [vmem:[%s300 + $0x68] sm:$0xff] %v447
        %528 = vst [vmem:[%s300 + $0x70] sm:$0xff] %v448
        %529 = vst [vmem:[%s300 + $0x78] sm:$0xff] %v449
        %530 = vst [vmem:[%s300 + $0x80] sm:$0xff] %v466
        %531 = vst [vmem:[%s300 + $0x88] sm:$0xff] %v467
        %532 = vst [vmem:[%s300 + $0x90] sm:$0xff] %v468
        %533 = vst [vmem:[%s300 + $0x98] sm:$0xff] %v469
        %534 = vst [vmem:[%s300 + $0xa0] sm:$0xff] %v470
        %535 = vst [vmem:[%s300 + $0xa8] sm:$0xff] %v471
        %536 = vst [vmem:[%s300 + $0xb0] sm:$0xff] %v472
        %537 = vst [vmem:[%s300 + $0xb8] sm:$0xff] %v473
        %538 = vst [vmem:[%s300 + $0xc0] sm:$0xff] %v474
        %539 = vst [vmem:[%s300 + $0xc8] sm:$0xff] %v475
        %540 = vst [vmem:[%s300 + $0xd0] sm:$0xff] %v476
        %541 = vst [vmem:[%s300 + $0xd8] sm:$0xff] %v477
        %542 = vst [vmem:[%s300 + $0xe0] sm:$0xff] %v478
        %543 = vst [vmem:[%s300 + $0xe8] sm:$0xff] %v479
        %544 = vst [vmem:[%s300 + $0xf0] sm:$0xff] %v480
        %545 = vst [vmem:[%s300 + $0xf8] sm:$0xff] %v481
        %546 = vst [vmem:[%s300 + $0x100] sm:$0xff] %v498
        %547 = vst [vmem:[%s300 + $0x108] sm:$0xff] %v499
        %548 = vst [vmem:[%s300 + $0x110] sm:$0xff] %v500
        %549 = vst [vmem:[%s300 + $0x118] sm:$0xff] %v501
        %550 = vst [vmem:[%s300 + $0x120] sm:$0xff] %v502
        %551 = vst [vmem:[%s300 + $0x128] sm:$0xff] %v503
        %552 = vst [vmem:[%s300 + $0x130] sm:$0xff] %v504
        %553 = vst [vmem:[%s300 + $0x138] sm:$0xff] %v505
        %554 = vst [vmem:[%s300 + $0x140] sm:$0xff] %v506
        %555 = vst [vmem:[%s300 + $0x148] sm:$0xff] %v507
        %556 = vst [vmem:[%s300 + $0x150] sm:$0xff] %v508
        %557 = vst [vmem:[%s300 + $0x158] sm:$0xff] %v509
        %558 = vst [vmem:[%s300 + $0x160] sm:$0xff] %v510
        %559 = vst [vmem:[%s300 + $0x168] sm:$0xff] %v511
        %560 = vst [vmem:[%s300 + $0x170] sm:$0xff] %v512
        %561 = vst [vmem:[%s300 + $0x178] sm:$0xff] %v513
        %s562 = sand.u32 %s89, 1
        %s563 = sand.u32 %s89, 1
        %s564 = smul.addr %s563, 384
        %s565 = scalar_lea.vmem [#allocation3], %s564
        // Predicated region
        $region59: #{layer_scale_permute.1} parent=53 // pred_check
          %p566 = pneg %p99
        $region60: #{layer_scale_permute.1} parent=53 // pred_check_branch
          %568 = sbr.rel (%p566) target = $region62
        $region61: #{layer_scale_permute.1} parent=53 // pred_region
          %s569 = smul.u32 48, %s17
          %s570 = smul.addr %s569, 2
          %s571 = sadd.s32 %s18, %s570
          %s572 = smul.addr %s571, 8
          %s573 = scalar_lea.vmem %s2, %s572
          // Predicated region
          $region63: #{layer_scale_permute.1} parent=61 // pred_check
            _
          $region64: #{layer_scale_permute.1} parent=61 // pred_check_branch
            %575 = sbr.rel (0) target = $region66
          $region65: #{layer_scale_permute.1} parent=61 // pred_region
            // Predicated region
            $region67: #{layer_scale_permute.1} parent=65 // pred_check
              _
            $region68: #{layer_scale_permute.1} parent=65 // pred_check_branch
              %577 = sbr.rel (0) target = $region70
            $region69: #{layer_scale_permute.1} parent=65 // pred_region
              // Predicated region
              $region82: #{layer_scale_permute.1} parent=69 // pred_check
                _
              $region83: #{layer_scale_permute.1} parent=69 // pred_check_branch
                %687 = sbr.rel (0) target = $region85
              $region84: #{layer_scale_permute.1} parent=69 // pred_region
                loop: start=0, step=1, limit=1
                $region86: #{layer_scale_permute.1} parent=84 // loop_pre_header
                  _
                $region87: #{layer_scale_permute.1} parent=84 // loop_header
                  %s689 = sphi 0, %s693
                  %p690 = scmp.ge.s32.totalorder %s689, 1
                  %s694 = sphi %s565, %s565
                  %s695 = sphi %s573, %s573
                $region88: #{layer_scale_permute.1} parent=84 // loop_header_branch
                  %692 = sbr.rel (%p690) target = $region92
                $region89: #{layer_scale_permute.1} parent=84 // loop_body
                  %v696 = vld [vmem:[%s694] sm:$0xff]
                  %697 = vst [vmem:[%s695] sm:$0xff] %v696
                  %v698 = vld [vmem:[%s694 + $0x8] sm:$0xff]
                  %699 = vst [vmem:[%s695 + $0x10] sm:$0xff] %v698
                  %v700 = vld [vmem:[%s694 + $0x10] sm:$0xff]
                  %701 = vst [vmem:[%s695 + $0x20] sm:$0xff] %v700
                  %v702 = vld [vmem:[%s694 + $0x18] sm:$0xff]
                  %703 = vst [vmem:[%s695 + $0x30] sm:$0xff] %v702
                  %v704 = vld [vmem:[%s694 + $0x20] sm:$0xff]
                  %705 = vst [vmem:[%s695 + $0x40] sm:$0xff] %v704
                  %v706 = vld [vmem:[%s694 + $0x28] sm:$0xff]
                  %707 = vst [vmem:[%s695 + $0x50] sm:$0xff] %v706
                  %v708 = vld [vmem:[%s694 + $0x30] sm:$0xff]
                  %709 = vst [vmem:[%s695 + $0x60] sm:$0xff] %v708
                  %v710 = vld [vmem:[%s694 + $0x38] sm:$0xff]
                  %711 = vst [vmem:[%s695 + $0x70] sm:$0xff] %v710
                  %v712 = vld [vmem:[%s694 + $0x40] sm:$0xff]
                  %713 = vst [vmem:[%s695 + $0x80] sm:$0xff] %v712
                  %v714 = vld [vmem:[%s694 + $0x48] sm:$0xff]
                  %715 = vst [vmem:[%s695 + $0x90] sm:$0xff] %v714
                  %v716 = vld [vmem:[%s694 + $0x50] sm:$0xff]
                  %717 = vst [vmem:[%s695 + $0xa0] sm:$0xff] %v716
                  %v718 = vld [vmem:[%s694 + $0x58] sm:$0xff]
                  %719 = vst [vmem:[%s695 + $0xb0] sm:$0xff] %v718
                  %v720 = vld [vmem:[%s694 + $0x60] sm:$0xff]
                  %721 = vst [vmem:[%s695 + $0xc0] sm:$0xff] %v720
                  %v722 = vld [vmem:[%s694 + $0x68] sm:$0xff]
                  %723 = vst [vmem:[%s695 + $0xd0] sm:$0xff] %v722
                  %v724 = vld [vmem:[%s694 + $0x70] sm:$0xff]
                  %725 = vst [vmem:[%s695 + $0xe0] sm:$0xff] %v724
                  %v726 = vld [vmem:[%s694 + $0x78] sm:$0xff]
                  %727 = vst [vmem:[%s695 + $0xf0] sm:$0xff] %v726
                  %v728 = vld [vmem:[%s694 + $0x80] sm:$0xff]
                  %729 = vst [vmem:[%s695 + $0x100] sm:$0xff] %v728
                  %v730 = vld [vmem:[%s694 + $0x88] sm:$0xff]
                  %731 = vst [vmem:[%s695 + $0x110] sm:$0xff] %v730
                  %v732 = vld [vmem:[%s694 + $0x90] sm:$0xff]
                  %733 = vst [vmem:[%s695 + $0x120] sm:$0xff] %v732
                  %v734 = vld [vmem:[%s694 + $0x98] sm:$0xff]
                  %735 = vst [vmem:[%s695 + $0x130] sm:$0xff] %v734
                  %v736 = vld [vmem:[%s694 + $0xa0] sm:$0xff]
                  %737 = vst [vmem:[%s695 + $0x140] sm:$0xff] %v736
                  %v738 = vld [vmem:[%s694 + $0xa8] sm:$0xff]
                  %739 = vst [vmem:[%s695 + $0x150] sm:$0xff] %v738
                  %v740 = vld [vmem:[%s694 + $0xb0] sm:$0xff]
                  %741 = vst [vmem:[%s695 + $0x160] sm:$0xff] %v740
                  %v742 = vld [vmem:[%s694 + $0xb8] sm:$0xff]
                  %743 = vst [vmem:[%s695 + $0x170] sm:$0xff] %v742
                  %v744 = vld [vmem:[%s694 + $0xc0] sm:$0xff]
                  %745 = vst [vmem:[%s695 + $0x180] sm:$0xff] %v744
                  %v746 = vld [vmem:[%s694 + $0xc8] sm:$0xff]
                  %747 = vst [vmem:[%s695 + $0x190] sm:$0xff] %v746
                  %v748 = vld [vmem:[%s694 + $0xd0] sm:$0xff]
                  %749 = vst [vmem:[%s695 + $0x1a0] sm:$0xff] %v748
                  %v750 = vld [vmem:[%s694 + $0xd8] sm:$0xff]
                  %751 = vst [vmem:[%s695 + $0x1b0] sm:$0xff] %v750
                  %v752 = vld [vmem:[%s694 + $0xe0] sm:$0xff]
                  %753 = vst [vmem:[%s695 + $0x1c0] sm:$0xff] %v752
                  %v754 = vld [vmem:[%s694 + $0xe8] sm:$0xff]
                  %755 = vst [vmem:[%s695 + $0x1d0] sm:$0xff] %v754
                  %v756 = vld [vmem:[%s694 + $0xf0] sm:$0xff]
                  %757 = vst [vmem:[%s695 + $0x1e0] sm:$0xff] %v756
                  %v758 = vld [vmem:[%s694 + $0xf8] sm:$0xff]
                  %759 = vst [vmem:[%s695 + $0x1f0] sm:$0xff] %v758
                  %v760 = vld [vmem:[%s694 + $0x100] sm:$0xff]
                  %761 = vst [vmem:[%s695 + $0x200] sm:$0xff] %v760
                  %v762 = vld [vmem:[%s694 + $0x108] sm:$0xff]
                  %763 = vst [vmem:[%s695 + $0x210] sm:$0xff] %v762
                  %v764 = vld [vmem:[%s694 + $0x110] sm:$0xff]
                  %765 = vst [vmem:[%s695 + $0x220] sm:$0xff] %v764
                  %v766 = vld [vmem:[%s694 + $0x118] sm:$0xff]
                  %767 = vst [vmem:[%s695 + $0x230] sm:$0xff] %v766
                  %v768 = vld [vmem:[%s694 + $0x120] sm:$0xff]
                  %769 = vst [vmem:[%s695 + $0x240] sm:$0xff] %v768
                  %v770 = vld [vmem:[%s694 + $0x128] sm:$0xff]
                  %771 = vst [vmem:[%s695 + $0x250] sm:$0xff] %v770
                  %v772 = vld [vmem:[%s694 + $0x130] sm:$0xff]
                  %773 = vst [vmem:[%s695 + $0x260] sm:$0xff] %v772
                  %v774 = vld [vmem:[%s694 + $0x138] sm:$0xff]
                  %775 = vst [vmem:[%s695 + $0x270] sm:$0xff] %v774
                  %v776 = vld [vmem:[%s694 + $0x140] sm:$0xff]
                  %777 = vst [vmem:[%s695 + $0x280] sm:$0xff] %v776
                  %v778 = vld [vmem:[%s694 + $0x148] sm:$0xff]
                  %779 = vst [vmem:[%s695 + $0x290] sm:$0xff] %v778
                  %v780 = vld [vmem:[%s694 + $0x150] sm:$0xff]
                  %781 = vst [vmem:[%s695 + $0x2a0] sm:$0xff] %v780
                  %v782 = vld [vmem:[%s694 + $0x158] sm:$0xff]
                  %783 = vst [vmem:[%s695 + $0x2b0] sm:$0xff] %v782
                  %v784 = vld [vmem:[%s694 + $0x160] sm:$0xff]
                  %785 = vst [vmem:[%s695 + $0x2c0] sm:$0xff] %v784
                  %v786 = vld [vmem:[%s694 + $0x168] sm:$0xff]
                  %787 = vst [vmem:[%s695 + $0x2d0] sm:$0xff] %v786
                  %v788 = vld [vmem:[%s694 + $0x170] sm:$0xff]
                  %789 = vst [vmem:[%s695 + $0x2e0] sm:$0xff] %v788
                  %v790 = vld [vmem:[%s694 + $0x178] sm:$0xff]
                  %791 = vst [vmem:[%s695 + $0x2f0] sm:$0xff] %v790
                $region90: #{layer_scale_permute.1} parent=84 // loop_footer
                  %s693 = sadd.s32 1, %s689
                $region91: #{layer_scale_permute.1} parent=84 // loop_footer_branch
                  %688 = sbr.rel target = $region87
                $region92: #{layer_scale_permute.1} parent=84 // loop_exit
                  _
              $region85: #{layer_scale_permute.1} parent=69 // pred_fallthru
                _
              // Predicated region
              $region93: #{layer_scale_permute.1} parent=69 // pred_check
                _
              $region94: #{layer_scale_permute.1} parent=69 // pred_check_branch
                %793 = sbr.rel target = $region96
              $region95: #{layer_scale_permute.1} parent=69 // pred_region
                _
              $region96: #{layer_scale_permute.1} parent=69 // pred_fallthru
                _
            $region70: #{layer_scale_permute.1} parent=65 // pred_fallthru
              _
            // Predicated region
            $region71: #{layer_scale_permute.1} parent=65 // pred_check
              _
            $region72: #{layer_scale_permute.1} parent=65 // pred_check_branch
              %579 = sbr.rel target = $region74
            $region73: #{layer_scale_permute.1} parent=65 // pred_region
              %s581 = ssub.s32 256, 1
              loop: start=0, step=1, limit=1
              $region75: #{layer_scale_permute.1} parent=73 // loop_pre_header
                _
              $region76: #{layer_scale_permute.1} parent=73 // loop_header
                %s583 = sphi 0, %s587
                %p584 = scmp.ge.s32.totalorder %s583, 1
                %s588 = sphi %s565, %s565
                %s589 = sphi %s573, %s573
              $region77: #{layer_scale_permute.1} parent=73 // loop_header_branch
                %586 = sbr.rel (%p584) target = $region81
              $region78: #{layer_scale_permute.1} parent=73 // loop_body
                %v590 = vld [vmem:[%s588] sm:%s581]
                %591 = vst [vmem:[%s589] sm:%s581] %v590
                %v592 = vld [vmem:[%s588 + $0x8] sm:%s581]
                %593 = vst [vmem:[%s589 + $0x10] sm:%s581] %v592
                %v594 = vld [vmem:[%s588 + $0x10] sm:%s581]
                %595 = vst [vmem:[%s589 + $0x20] sm:%s581] %v594
                %v596 = vld [vmem:[%s588 + $0x18] sm:%s581]
                %597 = vst [vmem:[%s589 + $0x30] sm:%s581] %v596
                %v598 = vld [vmem:[%s588 + $0x20] sm:%s581]
                %599 = vst [vmem:[%s589 + $0x40] sm:%s581] %v598
                %v600 = vld [vmem:[%s588 + $0x28] sm:%s581]
                %601 = vst [vmem:[%s589 + $0x50] sm:%s581] %v600
                %v602 = vld [vmem:[%s588 + $0x30] sm:%s581]
                %603 = vst [vmem:[%s589 + $0x60] sm:%s581] %v602
                %v604 = vld [vmem:[%s588 + $0x38] sm:%s581]
                %605 = vst [vmem:[%s589 + $0x70] sm:%s581] %v604
                %v606 = vld [vmem:[%s588 + $0x40] sm:%s581]
                %607 = vst [vmem:[%s589 + $0x80] sm:%s581] %v606
                %v608 = vld [vmem:[%s588 + $0x48] sm:%s581]
                %609 = vst [vmem:[%s589 + $0x90] sm:%s581] %v608
                %v610 = vld [vmem:[%s588 + $0x50] sm:%s581]
                %611 = vst [vmem:[%s589 + $0xa0] sm:%s581] %v610
                %v612 = vld [vmem:[%s588 + $0x58] sm:%s581]
                %613 = vst [vmem:[%s589 + $0xb0] sm:%s581] %v612
                %v614 = vld [vmem:[%s588 + $0x60] sm:%s581]
                %615 = vst [vmem:[%s589 + $0xc0] sm:%s581] %v614
                %v616 = vld [vmem:[%s588 + $0x68] sm:%s581]
                %617 = vst [vmem:[%s589 + $0xd0] sm:%s581] %v616
                %v618 = vld [vmem:[%s588 + $0x70] sm:%s581]
                %619 = vst [vmem:[%s589 + $0xe0] sm:%s581] %v618
                %v620 = vld [vmem:[%s588 + $0x78] sm:%s581]
                %621 = vst [vmem:[%s589 + $0xf0] sm:%s581] %v620
                %v622 = vld [vmem:[%s588 + $0x80] sm:%s581]
                %623 = vst [vmem:[%s589 + $0x100] sm:%s581] %v622
                %v624 = vld [vmem:[%s588 + $0x88] sm:%s581]
                %625 = vst [vmem:[%s589 + $0x110] sm:%s581] %v624
                %v626 = vld [vmem:[%s588 + $0x90] sm:%s581]
                %627 = vst [vmem:[%s589 + $0x120] sm:%s581] %v626
                %v628 = vld [vmem:[%s588 + $0x98] sm:%s581]
                %629 = vst [vmem:[%s589 + $0x130] sm:%s581] %v628
                %v630 = vld [vmem:[%s588 + $0xa0] sm:%s581]
                %631 = vst [vmem:[%s589 + $0x140] sm:%s581] %v630
                %v632 = vld [vmem:[%s588 + $0xa8] sm:%s581]
                %633 = vst [vmem:[%s589 + $0x150] sm:%s581] %v632
                %v634 = vld [vmem:[%s588 + $0xb0] sm:%s581]
                %635 = vst [vmem:[%s589 + $0x160] sm:%s581] %v634
                %v636 = vld [vmem:[%s588 + $0xb8] sm:%s581]
                %637 = vst [vmem:[%s589 + $0x170] sm:%s581] %v636
                %v638 = vld [vmem:[%s588 + $0xc0] sm:%s581]
                %639 = vst [vmem:[%s589 + $0x180] sm:%s581] %v638
                %v640 = vld [vmem:[%s588 + $0xc8] sm:%s581]
                %641 = vst [vmem:[%s589 + $0x190] sm:%s581] %v640
                %v642 = vld [vmem:[%s588 + $0xd0] sm:%s581]
                %643 = vst [vmem:[%s589 + $0x1a0] sm:%s581] %v642
                %v644 = vld [vmem:[%s588 + $0xd8] sm:%s581]
                %645 = vst [vmem:[%s589 + $0x1b0] sm:%s581] %v644
                %v646 = vld [vmem:[%s588 + $0xe0] sm:%s581]
                %647 = vst [vmem:[%s589 + $0x1c0] sm:%s581] %v646
                %v648 = vld [vmem:[%s588 + $0xe8] sm:%s581]
                %649 = vst [vmem:[%s589 + $0x1d0] sm:%s581] %v648
                %v650 = vld [vmem:[%s588 + $0xf0] sm:%s581]
                %651 = vst [vmem:[%s589 + $0x1e0] sm:%s581] %v650
                %v652 = vld [vmem:[%s588 + $0xf8] sm:%s581]
                %653 = vst [vmem:[%s589 + $0x1f0] sm:%s581] %v652
                %v654 = vld [vmem:[%s588 + $0x100] sm:%s581]
                %655 = vst [vmem:[%s589 + $0x200] sm:%s581] %v654
                %v656 = vld [vmem:[%s588 + $0x108] sm:%s581]
                %657 = vst [vmem:[%s589 + $0x210] sm:%s581] %v656
                %v658 = vld [vmem:[%s588 + $0x110] sm:%s581]
                %659 = vst [vmem:[%s589 + $0x220] sm:%s581] %v658
                %v660 = vld [vmem:[%s588 + $0x118] sm:%s581]
                %661 = vst [vmem:[%s589 + $0x230] sm:%s581] %v660
                %v662 = vld [vmem:[%s588 + $0x120] sm:%s581]
                %663 = vst [vmem:[%s589 + $0x240] sm:%s581] %v662
                %v664 = vld [vmem:[%s588 + $0x128] sm:%s581]
                %665 = vst [vmem:[%s589 + $0x250] sm:%s581] %v664
                %v666 = vld [vmem:[%s588 + $0x130] sm:%s581]
                %667 = vst [vmem:[%s589 + $0x260] sm:%s581] %v666
                %v668 = vld [vmem:[%s588 + $0x138] sm:%s581]
                %669 = vst [vmem:[%s589 + $0x270] sm:%s581] %v668
                %v670 = vld [vmem:[%s588 + $0x140] sm:%s581]
                %671 = vst [vmem:[%s589 + $0x280] sm:%s581] %v670
                %v672 = vld [vmem:[%s588 + $0x148] sm:%s581]
                %673 = vst [vmem:[%s589 + $0x290] sm:%s581] %v672
                %v674 = vld [vmem:[%s588 + $0x150] sm:%s581]
                %675 = vst [vmem:[%s589 + $0x2a0] sm:%s581] %v674
                %v676 = vld [vmem:[%s588 + $0x158] sm:%s581]
                %677 = vst [vmem:[%s589 + $0x2b0] sm:%s581] %v676
                %v678 = vld [vmem:[%s588 + $0x160] sm:%s581]
                %679 = vst [vmem:[%s589 + $0x2c0] sm:%s581] %v678
                %v680 = vld [vmem:[%s588 + $0x168] sm:%s581]
                %681 = vst [vmem:[%s589 + $0x2d0] sm:%s581] %v680
                %v682 = vld [vmem:[%s588 + $0x170] sm:%s581]
                %683 = vst [vmem:[%s589 + $0x2e0] sm:%s581] %v682
                %v684 = vld [vmem:[%s588 + $0x178] sm:%s581]
                %685 = vst [vmem:[%s589 + $0x2f0] sm:%s581] %v684
              $region79: #{layer_scale_permute.1} parent=73 // loop_footer
                %s587 = sadd.s32 1, %s583
              $region80: #{layer_scale_permute.1} parent=73 // loop_footer_branch
                %582 = sbr.rel target = $region76
              $region81: #{layer_scale_permute.1} parent=73 // loop_exit
                _
            $region74: #{layer_scale_permute.1} parent=65 // pred_fallthru
              _
          $region66: #{layer_scale_permute.1} parent=61 // pred_fallthru
            _
          %794 = vnop
        $region62: #{layer_scale_permute.1} parent=53 // pred_fallthru
          _
      $region54: #{layer_scale_permute.1} parent=5 // pred_fallthru
        _
      %p795 = scmp.le.s32.totalorder 2, %s8
      // Predicated region
      $region97: #{layer_scale_permute.1} parent=5 // pred_check
        %p796 = pneg %p795
      $region98: #{layer_scale_permute.1} parent=5 // pred_check_branch
        %798 = sbr.rel (%p796) target = $region100
      $region99: #{layer_scale_permute.1} parent=5 // pred_region
        %s799 = ssub.s32 %s8, 2
        // Predicated region
        $region101: #{layer_scale_permute.1} parent=99 // pred_check
          %p800 = pneg %p105
        $region102: #{layer_scale_permute.1} parent=99 // pred_check_branch
          %802 = sbr.rel (%p800) target = $region104
        $region103: #{layer_scale_permute.1} parent=99 // pred_region
          %s803 = sand.u32 %s90, 1
          %s804 = sand.u32 %s90, 1
          %s805 = smul.addr %s804, 384
          %s806 = scalar_lea.vmem [#allocation3], %s805
        $region104: #{layer_scale_permute.1} parent=99 // pred_fallthru
          _
      $region100: #{layer_scale_permute.1} parent=5 // pred_fallthru
        _
    $region6: #{layer_scale_permute.1} parent=1 // loop_footer
      %s12 = sadd.s32 1, %s8
    $region7: #{layer_scale_permute.1} parent=1 // loop_footer_branch
      %7 = sbr.rel target = $region3
    $region8: #{layer_scale_permute.1} parent=1 // loop_exit
      _

</llo_original>
